<compile_context>
chip_gen: v6e
topology: v6e:2x2x1
jax: 0.10.0
libtpu: 0.0.40
codegen_flags: <defaults>
</compile_context>

<pallas_src>
import math
import functools

import jax
import jax.numpy as jnp
from jax.experimental import pallas as pl
from jax.experimental.pallas import tpu as pltpu


def _hadamard_matrix(n: int, dtype=jnp.float32) -> jnp.ndarray:
    """Sylvester-construction Hadamard matrix of size n x n (n power of 2)."""
    assert n > 0 and (n & (n - 1)) == 0, "group_size must be a power of 2"
    h = jnp.array([[1.0]], dtype=jnp.float32)
    while h.shape[0] < n:
        h = jnp.block([[h, h], [h, -h]])
    return h.astype(dtype)


def _hadamard_kernel(x_ref, h_ref, o_ref, *, scale):
    # (tm, G) @ (G, G) on the MXU with f32 accumulation, then scale on the VPU.
    acc = jnp.dot(x_ref[...], h_ref[...], preferred_element_type=jnp.float32)
    o_ref[...] = (acc * scale).astype(o_ref.dtype)


def _pick_row_tile(rows: int, cap: int) -> int:
    """Largest multiple-of-8 divisor of `rows` that is <= cap, preferring a
    grid of length >= 2 so v7x's two TensorCores can both be used."""
    assert rows % 8 == 0
    limit = min(cap, rows)
    if rows >= 16:
        # keep at least 2 grid steps when the row count allows it
        limit = min(limit, max(8, (rows // 2) // 8 * 8))
    best = 8
    for t in range(8, limit + 1, 8):
        if rows % t == 0:
            best = t
    return best


class HadamardTransform:
    def __init__(self, group_size: int = 128):
        self.group_size = group_size
        self.scale = 1.0 / math.sqrt(group_size)
        self._h_f32 = _hadamard_matrix(group_size, jnp.float32)
        self._h_cache = {jnp.dtype(jnp.float32): self._h_f32}

    def _h_for(self, dtype):
        dt = jnp.dtype(dtype)
        if dt not in self._h_cache:
            if dt in (jnp.dtype(jnp.bfloat16), jnp.dtype(jnp.float16)):
                # +/-1 entries are exact in half precision -> native-rate MXU.
                self._h_cache[dt] = self._h_f32.astype(dt)
            else:
                self._h_cache[dt] = self._h_f32
        return self._h_cache[dt]

    def __call__(self, x: jnp.ndarray, inv_t: bool = False, dim: int = -1):
        # NOTE: inv_t / dim are accepted but ignored, matching the reference
        # PyTorch module's forward (it always flattens to (-1, group_size)).
        x_shape = x.shape
        g = self.group_size
        total = math.prod(x_shape)
        assert total % g == 0, "total elements must be divisible by group_size"
        rows = total // g

        # TODO(synk): for NCHW inputs this reshape may force an HBM relayout
        # copy; tiling the original shape directly would avoid it but is
        # shape-specific.
        x2 = x if (x.ndim == 2 and x.shape[-1] == g) else x.reshape(rows, g)

        # Pad rows up to a multiple of 8 so we never fall back to a single
        # whole-array block (which could exceed scoped VMEM for big inputs).
        pad = (-rows) % 8
        rows_p = rows + pad
        if pad:
            x2 = jnp.pad(x2, ((0, pad), (0, 0)))

        itemsize = jnp.dtype(x.dtype).itemsize
        # ~1 MiB per block: tm cap of 2048 rows (f32) / 4096 rows (bf16).
        # 2x(in + out) double-buffered blocks + H stays well under the 16 MiB
        # default scoped-VMEM limit on v5e (and the 32 MiB v6e/v7x defaults).
        cap = max(8, (1 << 20) // (g * itemsize))
        tm = _pick_row_tile(rows_p, cap)
        grid = (rows_p // tm,)

        h = self._h_for(x.dtype)
        kernel = functools.partial(_hadamard_kernel, scale=self.scale)

        cost = pl.CostEstimate(
            flops=2 * rows_p * g * g,
            transcendentals=0,
            bytes_accessed=2 * rows_p * g * itemsize
            + g * g * jnp.dtype(h.dtype).itemsize,
        )

        out = pl.pallas_call(
            kernel,
            out_shape=jax.ShapeDtypeStruct((rows_p, g), x.dtype),
            grid_spec=pltpu.PrefetchScalarGridSpec(
                num_scalar_prefetch=0,
                grid=grid,
                in_specs=[
                    pl.BlockSpec((tm, g), lambda i: (i, 0)),
                    pl.BlockSpec((g, g), lambda i: (0, 0)),  # H: constant block
                ],
                out_specs=pl.BlockSpec((tm, g), lambda i: (i, 0)),
            ),
            compiler_params=pltpu.CompilerParams(
                dimension_semantics=("parallel",),
            ),
            cost_estimate=cost,
        )(x2, h)

        if pad:
            out = out[:rows]
        return out.reshape(x_shape)


def _reference(x, group_size, scale):
    """Pure-JAX reference: FWHT via matmul with the Hadamard matrix (f32)."""
    h = _hadamard_matrix(group_size, jnp.float32)
    x2 = x.reshape(-1, group_size).astype(jnp.float32)
    y = (x2 @ h) * scale
    return y.reshape(x.shape).astype(x.dtype)


if __name__ == "__main__":
    key = jax.random.PRNGKey(0)
    # NCHW-like input; total elements (2*4*16*16 = 2048) divisible by 128.
    x = jax.random.normal(key, (2, 4, 16, 16), dtype=jnp.float32)

    ht = HadamardTransform(group_size=128)

    # f32 path
    y = jax.block_until_ready(ht(x))
    y_ref = _reference(x, 128, ht.scale)
    assert y.shape == x.shape
    assert jnp.allclose(y, y_ref, atol=1e-4, rtol=1e-4), "f32 mismatch vs reference"

    # bf16 path (H cast to bf16, f32 accumulation on the MXU)
    xb = x.astype(jnp.bfloat16)
    yb = jax.block_until_ready(ht(xb))
    yb_ref = _reference(xb, 128, ht.scale)
    assert jnp.allclose(
        yb.astype(jnp.float32), yb_ref.astype(jnp.float32), atol=5e-2, rtol=5e-2
    ), "bf16 mismatch vs reference"

    print("KERNEL_OK")
</pallas_src>

<mosaic_0001>
module attributes {stable_mosaic.version = 11 : i64} {
  func.func @_hadamard_kernel(%arg0: i32, %arg1: memref<8x128xf32, #tpu.memory_space<vmem>>, %arg2: memref<128x128xf32, #tpu.memory_space<vmem>>, %arg3: memref<8x128xf32, #tpu.memory_space<vmem>>) attributes {dimension_semantics = [#tpu.dimension_semantics<parallel>], iteration_bounds = array<i64: 2>, scalar_prefetch = 0 : i64, scratch_operands = 0 : i64, tpu.core_type = #tpu.core_type<tc>, window_params = [{transform_indices = @transform_0, window_bounds = array<i64: 8, 128>}, {pipeline_mode = #tpu.pipeline_mode<synchronous>, transform_indices = @transform_1, window_bounds = array<i64: 128, 128>}, {transform_indices = @transform_2, window_bounds = array<i64: 8, 128>}]} {
    %c0 = arith.constant 0 : index
    %c0_0 = arith.constant 0 : index
    %0 = vector.load %arg1[%c0, %c0_0] : memref<8x128xf32, #tpu.memory_space<vmem>>, vector<8x128xf32>
    %c0_1 = arith.constant 0 : index
    %c0_2 = arith.constant 0 : index
    %1 = vector.load %arg2[%c0_1, %c0_2] : memref<128x128xf32, #tpu.memory_space<vmem>>, vector<128x128xf32>
    %cst = arith.constant dense<0.000000e+00> : vector<8x128xf32>
    %2 = tpu.matmul %0, %1, %cst {dimension_numbers = #tpu.dot_dimension_numbers<[1], [0], [0], [1], [0, 0, 1, 1], [], []>} : vector<8x128xf32>, vector<128x128xf32>, vector<8x128xf32> -> vector<8x128xf32>
    %cst_3 = arith.constant 0.0883883461 : f32
    %3 = vector.broadcast %cst_3 : f32 to vector<8x128xf32>
    %4 = arith.mulf %2, %3 : vector<8x128xf32>
    %c0_4 = arith.constant 0 : index
    %c0_5 = arith.constant 0 : index
    %5 = vector.load %arg3[%c0_4, %c0_5] : memref<8x128xf32, #tpu.memory_space<vmem>>, vector<8x128xf32>
    tpu.vector_store %arg3[%c0_4, %c0_5], %4 {strides = array<i32>} : memref<8x128xf32, #tpu.memory_space<vmem>>, vector<8x128xf32>,
    return
  }
  func.func @transform_0(%arg0: i32) -> (i32, i32) {
    %c0_i32 = arith.constant 0 : i32
    %c0_i32_0 = arith.constant 0 : i32
    return %arg0, %c0_i32 : i32, i32
  }
  func.func @transform_1(%arg0: i32) -> (i32, i32) {
    %c0_i32 = arith.constant 0 : i32
    %c0_i32_0 = arith.constant 0 : i32
    %c0_i32_1 = arith.constant 0 : i32
    return %c0_i32, %c0_i32_0 : i32, i32
  }
  func.func @transform_2(%arg0: i32) -> (i32, i32) {
    %c0_i32 = arith.constant 0 : i32
    %c0_i32_0 = arith.constant 0 : i32
    return %arg0, %c0_i32 : i32, i32
  }
}

</mosaic_0001>

<llo_original>
// kernel: tpu_custom_call.1
$region0: #{tpu_custom_call.1}
  #allocation0 [shape = 'u32[]', space=smem, size = 0x4, offset = 0x4, fixed_abs, tag = 'smem constant byte address 0x4 - core index']
  #allocation1 [shape = 'u32[144,128]{1,0:T(1,128)}', space=vmem, size = 0x12000, scoped, tag = 'internal scratch']
  %s0 = inlined_call_operand.hbm [shape: f32[16,128], index: 0, kind: input, shape index: {}]
  %s1 = inlined_call_operand.hbm [shape: f32[128,128], index: 1, kind: input, shape index: {}]
  %s2 = inlined_call_operand.hbm [shape: f32[16,128], index: 2, kind: output, shape index: {}]
  %s3 = sld [smem:[#allocation0]]
  $region49: #{tpu_custom_call.1} parent=0
    _
  %s5 = ssub.s32 1, %s3
  %s6 = scalar_select 0, %s5, %s3
  $region1: #{tpu_custom_call.1} parent=0
    #allocation2 [shape = 'u8[8192]{0}', space=vmem, size = 0x2000, scoped, tag = 'input window, operand 0']
    #allocation3 [shape = 's32[2]{0}', space=sflag, size = 0x8, scoped, tag = 'scoped memory for tpu_custom_call.1']
    #allocation4 [shape = 's32[2]{0}', space=sflag, size = 0x8, scoped, tag = 'scoped memory for tpu_custom_call.1']
    #allocation5 [shape = 'u8[65536]{0}', space=vmem, size = 0x10000, scoped, tag = 'input window, operand 1, single buffered']
    #allocation6 [shape = 's32[1]{0}', space=sflag, size = 0x4, scoped, tag = 'scoped memory for tpu_custom_call.1']
    #allocation7 [shape = 'u8[8192]{0}', space=vmem, size = 0x2000, scoped, tag = 'output window, operand 0']
    %7 = vsyncpa [#allocation3], 0
    %s8 = scalar_lea.sflag [#allocation3], 1
    %9 = vsyncpa %s8, 0
    %10 = vsyncpa [#allocation6], 0
    %11 = vsyncpa [#allocation4], 0
    %s12 = scalar_lea.sflag [#allocation4], 1
    %13 = vsyncpa %s12, 0
    loop: start=0, step=1, limit=4
    $region2: #{tpu_custom_call.1} parent=1 // loop_pre_header
      _
    $region3: #{tpu_custom_call.1} parent=1 // loop_header
      %s15 = sphi 0, %s19
      %p16 = scmp.ge.s32.totalorder %s15, 4
      %s25 = sphi 0, %s27
      %s28 = sphi 0, %s25
      %s29 = sphi 0, %s28
      %s45 = sphi 0, %s29
      %s49 = sphi 0, %s49
      %s51 = sphi 0, %s49
      %s52 = sphi 0, %s51
      %s66 = sphi 0, %s52
      %s72 = sphi 0, %s74
      %s75 = sphi 0, %s72
      %s76 = sphi 0, %s75
      %s92 = sphi 0, %s76
    $region4: #{tpu_custom_call.1} parent=1 // loop_header_branch
      %18 = sbr.rel (%p16) target = $region8
    $region5: #{tpu_custom_call.1} parent=1 // loop_body
      %s20 = ssub.s32 %s15, 1
      %s21 = ssub.s32 %s15, 2
      %s22 = sadd.s32 %s15, 1
      %s23 = ssub.s32 %s15, %s22
      %p24 = scmp.eq.s32.totalorder %s23, 0
      %s26 = sadd.s32 %s25, 1
      %s27 = scalar_select %p24, %s25, %s26
      %p30 = pneg %p24
      %p31 = scmp.eq.s32.totalorder %s15, 1
      %p32 = por %p30, %p31
      %p33 = scmp.ne.s32.totalorder %s25, %s28
      %p34 = scmp.eq.s32.totalorder %s15, 0
      %p35 = por %p33, %p34
      %p36 = scmp.ne.s32.totalorder %s25, %s28
      %p37 = scmp.eq.s32.totalorder %s20, 1
      %p38 = por %p36, %p37
      %p39 = scmp.ne.s32.totalorder %s28, %s29
      %p40 = scmp.eq.s32.totalorder %s20, 0
      %p41 = por %p39, %p40
      %p42 = scmp.ne.s32.totalorder %s28, %s29
      %p43 = scmp.eq.s32.totalorder %s21, 1
      %p44 = por %p42, %p43
      %p46 = scmp.ne.s32.totalorder %s29, %s45
      %p47 = scmp.eq.s32.totalorder %s21, 0
      %p48 = por %p46, %p47
      %s50 = sadd.s32 %s49, 1
      %p53 = scmp.eq.s32.totalorder %s15, 1
      %p54 = scmp.ne.s32.totalorder %s49, %s51
      %p55 = scmp.eq.s32.totalorder %s15, 0
      %p56 = por %p54, %p55
      %p57 = scmp.ne.s32.totalorder %s49, %s51
      %p58 = scmp.eq.s32.totalorder %s20, 1
      %p59 = por %p57, %p58
      %p60 = scmp.ne.s32.totalorder %s51, %s52
      %p61 = scmp.eq.s32.totalorder %s20, 0
      %p62 = por %p60, %p61
      %p63 = scmp.ne.s32.totalorder %s51, %s52
      %p64 = scmp.eq.s32.totalorder %s21, 1
      %p65 = por %p63, %p64
      %p67 = scmp.ne.s32.totalorder %s52, %s66
      %p68 = scmp.eq.s32.totalorder %s21, 0
      %p69 = por %p67, %p68
      %s70 = ssub.s32 %s15, %s22
      %p71 = scmp.eq.s32.totalorder %s70, 0
      %s73 = sadd.s32 %s72, 1
      %s74 = scalar_select %p71, %s72, %s73
      %p77 = pneg %p71
      %p78 = scmp.eq.s32.totalorder %s15, 1
      %p79 = por %p77, %p78
      %p80 = scmp.ne.s32.totalorder %s72, %s75
      %p81 = scmp.eq.s32.totalorder %s15, 0
      %p82 = por %p80, %p81
      %p83 = scmp.ne.s32.totalorder %s72, %s75
      %p84 = scmp.eq.s32.totalorder %s20, 1
      %p85 = por %p83, %p84
      %p86 = scmp.ne.s32.totalorder %s75, %s76
      %p87 = scmp.eq.s32.totalorder %s20, 0
      %p88 = por %p86, %p87
      %p89 = scmp.ne.s32.totalorder %s75, %s76
      %p90 = scmp.eq.s32.totalorder %s21, 1
      %p91 = por %p89, %p90
      %p93 = scmp.ne.s32.totalorder %s76, %s92
      %p94 = scmp.eq.s32.totalorder %s21, 0
      %p95 = por %p93, %p94
      %p96 = scmp.le.s32.totalorder 1, %s15
      %p97 = scmp.lt.s32.totalorder %s15, 3
      %p98 = pnand %p96, %p97
      %p99 = pneg %p98
      // Predicated region
      $region9: #{tpu_custom_call.1} parent=5 // pred_check
        _
      $region10: #{tpu_custom_call.1} parent=5 // pred_check_branch
        %101 = sbr.rel (%p98) target = $region12
      $region11: #{tpu_custom_call.1} parent=5 // pred_region
        %s102 = ssub.s32 %s15, 1
        // Predicated region
        $region13: #{tpu_custom_call.1} parent=11 // pred_check
          %p103 = pneg %p62
        $region14: #{tpu_custom_call.1} parent=11 // pred_check_branch
          %105 = sbr.rel (%p103) target = $region16
        $region15: #{tpu_custom_call.1} parent=11 // pred_region
          %s107 = ssub.s32 2048, 2048
          %108 = vsyncadd [#allocation6], %s107
          %s109 = sshll.u32 [#allocation5], 4
          %s110 = int_to_ptr.vmem [resolvable:$true] %s109
          %115 = dma.hbm_to_vmem [thread:$0]  %s1, 2048, %s110, [#allocation6], 128, 128, 8
        $region16: #{tpu_custom_call.1} parent=11 // pred_fallthru
          _
      $region12: #{tpu_custom_call.1} parent=5 // pred_fallthru
        _
      %p116 = scmp.lt.s32.totalorder %s15, 2
      // Predicated region
      $region17: #{tpu_custom_call.1} parent=5 // pred_check
        %p117 = pneg %p116
      $region18: #{tpu_custom_call.1} parent=5 // pred_check_branch
        %119 = sbr.rel (%p117) target = $region20
      $region19: #{tpu_custom_call.1} parent=5 // pred_region
        // Predicated region
        $region21: #{tpu_custom_call.1} parent=19 // pred_check
          %p120 = pneg %p35
        $region22: #{tpu_custom_call.1} parent=19 // pred_check_branch
          %122 = sbr.rel (%p120) target = $region24
        $region23: #{tpu_custom_call.1} parent=19 // pred_region
          %s123 = sand.u32 %s25, 1
          %s124 = scalar_lea.sflag [#allocation3], %s123
          %s125 = sand.u32 %s25, 1
          %s126 = smul.addr %s125, 8
          %s127 = scalar_lea.vmem [#allocation2], %s126
          %s129 = ssub.s32 128, 128
          %130 = vsyncadd %s124, %s129
          %s131 = smul.addr %s15, 128
          %s132 = scalar_lea.hbm %s0, %s131
          %s134 = sshll.u32 %s127, 4
          %s135 = int_to_ptr.vmem [resolvable:$true] %s134
          %137 = dma.hbm_to_vmem [thread:$0]  %s132, 128, %s135, %s124
        $region24: #{tpu_custom_call.1} parent=19 // pred_fallthru
          _
      $region20: #{tpu_custom_call.1} parent=5 // pred_fallthru
        _
      %p138 = scmp.le.s32.totalorder 1, %s15
      %p139 = scmp.lt.s32.totalorder %s15, 3
      %p140 = pnand %p138, %p139
      %p141 = pneg %p140
      // Predicated region
      $region25: #{tpu_custom_call.1} parent=5 // pred_check
        _
      $region26: #{tpu_custom_call.1} parent=5 // pred_check_branch
        %143 = sbr.rel (%p140) target = $region28
      $region27: #{tpu_custom_call.1} parent=5 // pred_region
        %s144 = ssub.s32 %s15, 1
        %s145 = sand.u32 %s28, 1
        %s146 = scalar_lea.sflag [#allocation3], %s145
        %s147 = sand.u32 %s28, 1
        %s148 = smul.addr %s147, 8
        %s149 = scalar_lea.vmem [#allocation2], %s148
        // Predicated region
        $region29: #{tpu_custom_call.1} parent=27 // pred_check
          %p150 = pneg %p41
        $region30: #{tpu_custom_call.1} parent=27 // pred_check_branch
          %152 = sbr.rel (%p150) target = $region32
        $region31: #{tpu_custom_call.1} parent=27 // pred_region
          %153 = dma.done %s146, 128
        $region32: #{tpu_custom_call.1} parent=27 // pred_fallthru
          _
        // Predicated region
        $region33: #{tpu_custom_call.1} parent=27 // pred_check
          %p154 = pneg %p62
        $region34: #{tpu_custom_call.1} parent=27 // pred_check_branch
          %156 = sbr.rel (%p154) target = $region36
        $region35: #{tpu_custom_call.1} parent=27 // pred_region
          %157 = dma.done [#allocation6], 2048
        $region36: #{tpu_custom_call.1} parent=27 // pred_fallthru
          _
        %s158 = sand.u32 %s28, 1
        %s159 = scalar_lea.sflag [#allocation3], %s158
        %s160 = sand.u32 %s28, 1
        %s161 = smul.addr %s160, 8
        %s162 = scalar_lea.vmem [#allocation2], %s161
        %p163 = pneg %p41
        %p164 = pneg %p38
        %p165 = pneg %p62
        %p166 = pneg %p59
        %p167 = pneg %p88
        %p168 = pneg %p85
        %s169 = sand.u32 %s75, 1
        %s170 = scalar_lea.sflag [#allocation4], %s169
        %s171 = sand.u32 %s75, 1
        %s172 = smul.addr %s171, 8
        %s173 = scalar_lea.vmem [#allocation7], %s172
        %v174 = vld [vmem:[%s149] sm:$0xff]
        %v175 = vld [vmem:[#allocation5] sm:$0xff]
        %v176 = vld [vmem:[#allocation5 + $0x8] sm:$0xff]
        %v177 = vld [vmem:[#allocation5 + $0x10] sm:$0xff]
        %v178 = vld [vmem:[#allocation5 + $0x18] sm:$0xff]
        %v179 = vld [vmem:[#allocation5 + $0x20] sm:$0xff]
        %v180 = vld [vmem:[#allocation5 + $0x28] sm:$0xff]
        %v181 = vld [vmem:[#allocation5 + $0x30] sm:$0xff]
        %v182 = vld [vmem:[#allocation5 + $0x38] sm:$0xff]
        %v183 = vld [vmem:[#allocation5 + $0x40] sm:$0xff]
        %v184 = vld [vmem:[#allocation5 + $0x48] sm:$0xff]
        %v185 = vld [vmem:[#allocation5 + $0x50] sm:$0xff]
        %v186 = vld [vmem:[#allocation5 + $0x58] sm:$0xff]
        %v187 = vld [vmem:[#allocation5 + $0x60] sm:$0xff]
        %v188 = vld [vmem:[#allocation5 + $0x68] sm:$0xff]
        %v189 = vld [vmem:[#allocation5 + $0x70] sm:$0xff]
        %v190 = vld [vmem:[#allocation5 + $0x78] sm:$0xff]
        %191 = vmatprep.subr.mxu0 0.0
        %192 = vmatpush1.msra.mxu0 %v190
        %193 = vmatprep.subr.mxu0 0.0
        %194 = vmatpush1.msra.mxu0 %v189
        %195 = vmatprep.subr.mxu0 0.0
        %196 = vmatpush1.msra.mxu0 %v188
        %197 = vmatprep.subr.mxu0 0.0
        %198 = vmatpush1.msra.mxu0 %v187
        %199 = vmatprep.subr.mxu0 0.0
        %200 = vmatpush1.msra.mxu0 %v186
        %201 = vmatprep.subr.mxu0 0.0
        %202 = vmatpush1.msra.mxu0 %v185
        %203 = vmatprep.subr.mxu0 0.0
        %204 = vmatpush1.msra.mxu0 %v184
        %205 = vmatprep.subr.mxu0 0.0
        %206 = vmatpush1.msra.mxu0 %v183
        %207 = vmatprep.subr.mxu0 0.0
        %208 = vmatpush1.msra.mxu0 %v182
        %209 = vmatprep.subr.mxu0 0.0
        %210 = vmatpush1.msra.mxu0 %v181
        %211 = vmatprep.subr.mxu0 0.0
        %212 = vmatpush1.msra.mxu0 %v180
        %213 = vmatprep.subr.mxu0 0.0
        %214 = vmatpush1.msra.mxu0 %v179
        %215 = vmatprep.subr.mxu0 0.0
        %216 = vmatpush1.msra.mxu0 %v178
        %217 = vmatprep.subr.mxu0 0.0
        %218 = vmatpush1.msra.mxu0 %v177
        %219 = vmatprep.subr.mxu0 0.0
        %220 = vmatpush1.msra.mxu0 %v176
        %221 = vmatprep.subr.mxu0 0.0
        %222 = vmatpush1.msra.mxu0 %v175
        %223 = vmatprep.subr.mxu0 0.0
        %224 = vmatpush2.msra.mxu0 0.0
        %225 = vmatprep.subr.mxu0 0.0
        %226 = vmatpush2.msra.mxu0 0.0
        %227 = vmatprep.subr.mxu0 0.0
        %228 = vmatpush2.msra.mxu0 0.0
        %229 = vmatprep.subr.mxu0 0.0
        %230 = vmatpush2.msra.mxu0 0.0
        %231 = vmatprep.subr.mxu0 0.0
        %232 = vmatpush2.msra.mxu0 0.0
        %233 = vmatprep.subr.mxu0 0.0
        %234 = vmatpush2.msra.mxu0 0.0
        %235 = vmatprep.subr.mxu0 0.0
        %236 = vmatpush2.msra.mxu0 0.0
        %237 = vmatprep.subr.mxu0 0.0
        %238 = vmatpush2.msra.mxu0 0.0
        %239 = vmatprep.subr.mxu0 0.0
        %240 = vmatpush2.msra.mxu0 0.0
        %241 = vmatprep.subr.mxu0 0.0
        %242 = vmatpush2.msra.mxu0 0.0
        %243 = vmatprep.subr.mxu0 0.0
        %244 = vmatpush2.msra.mxu0 0.0
        %245 = vmatprep.subr.mxu0 0.0
        %246 = vmatpush2.msra.mxu0 0.0
        %247 = vmatprep.subr.mxu0 0.0
        %248 = vmatpush2.msra.mxu0 0.0
        %249 = vmatprep.subr.mxu0 0.0
        %250 = vmatpush2.msra.mxu0 0.0
        %251 = vmatprep.subr.mxu0 0.0
        %252 = vmatpush2.msra.mxu0 0.0
        %253 = vmatprep.subr.mxu0 0.0
        %254 = vmatpush2.msra.mxu0 0.0
        %255 = vmatprep.mubr.f32.mxu0 0.0
        %256 = vmatmul.mubr.f32.gmra.mxu0 %v174
        %v257 = vpop.f32.mrf.mxu0
        %v258 = vadd.f32 0.0, %v257
        %v259 = vpop.f32.mrf.mxu0
        %260 = vdwg.mxu0
        %v261 = vmul.f32 %v258, 0.088388346
        %262 = vst [vmem:[%s173] sm:$0xff] %v261
        %s263 = sand.u32 %s75, 1
        %s264 = scalar_lea.sflag [#allocation4], %s263
        %s265 = sand.u32 %s75, 1
        %s266 = smul.addr %s265, 8
        %s267 = scalar_lea.vmem [#allocation7], %s266
        // Predicated region
        $region37: #{tpu_custom_call.1} parent=27 // pred_check
          %p268 = pneg %p85
        $region38: #{tpu_custom_call.1} parent=27 // pred_check_branch
          %270 = sbr.rel (%p268) target = $region40
        $region39: #{tpu_custom_call.1} parent=27 // pred_region
          %s272 = ssub.s32 128, 128
          %273 = vsyncadd %s264, %s272
          %s274 = smul.addr %s20, 128
          %s275 = scalar_lea.hbm %s2, %s274
          %s277 = sshll.u32 %s267, 4
          %s278 = int_to_ptr.vmem [resolvable:$true] %s277
          %280 = dma.vmem_to_hbm [thread:$0]  %s278, 128, %s275, %s264
        $region40: #{tpu_custom_call.1} parent=27 // pred_fallthru
          _
      $region28: #{tpu_custom_call.1} parent=5 // pred_fallthru
        _
      %p281 = scmp.le.s32.totalorder 2, %s15
      // Predicated region
      $region41: #{tpu_custom_call.1} parent=5 // pred_check
        %p282 = pneg %p281
      $region42: #{tpu_custom_call.1} parent=5 // pred_check_branch
        %284 = sbr.rel (%p282) target = $region44
      $region43: #{tpu_custom_call.1} parent=5 // pred_region
        %s285 = ssub.s32 %s15, 2
        // Predicated region
        $region45: #{tpu_custom_call.1} parent=43 // pred_check
          %p286 = pneg %p91
        $region46: #{tpu_custom_call.1} parent=43 // pred_check_branch
          %288 = sbr.rel (%p286) target = $region48
        $region47: #{tpu_custom_call.1} parent=43 // pred_region
          %s289 = sand.u32 %s76, 1
          %s290 = scalar_lea.sflag [#allocation4], %s289
          %s291 = sand.u32 %s76, 1
          %s292 = smul.addr %s291, 8
          %s293 = scalar_lea.vmem [#allocation7], %s292
          %294 = dma.done %s290, 128
        $region48: #{tpu_custom_call.1} parent=43 // pred_fallthru
          _
      $region44: #{tpu_custom_call.1} parent=5 // pred_fallthru
        _
    $region6: #{tpu_custom_call.1} parent=1 // loop_footer
      %s19 = sadd.s32 1, %s15
    $region7: #{tpu_custom_call.1} parent=1 // loop_footer_branch
      %14 = sbr.rel target = $region3
    $region8: #{tpu_custom_call.1} parent=1 // loop_exit
      _
    %295 = vsyncpa [#allocation3], 1
    %s296 = scalar_lea.sflag [#allocation3], 1
    %297 = vsyncpa %s296, 1
    %298 = vsyncpa [#allocation6], 1
    %299 = vsyncpa [#allocation4], 1
    %s300 = scalar_lea.sflag [#allocation4], 1
    %301 = vsyncpa %s300, 1

</llo_original>
